<compile_context>
chip_gen: v7x
topology: tpu7x:2x2x1
jax: 0.10.0
libtpu: 0.0.40
codegen_flags: <defaults>
</compile_context>

<pallas_src>
import math
from functools import partial

import jax
import jax.numpy as jnp
from jax.experimental import pallas as pl
from jax.experimental.pallas import tpu as pltpu


def _round_up(x, m):
    return ((x + m - 1) // m) * m


def _cdiv(a, b):
    return -(-a // b)


def _vmem_capacity_bytes():
    """Physical VMEM of the local TPU (conservative fallback: v7x 64 MiB/TC)."""
    try:
        info = pltpu.get_tpu_info()
        cap = getattr(info, "vmem_capacity_bytes", None)
        if cap:
            return int(cap)
    except Exception:
        pass
    return 64 * 2**20


def prepare_params(params):
    """One-time (cache per model) parameter prep.

    Wq is kept in PyTorch (out, in) layout -- after the fold it is only ever
    contracted against the projected caption row, so no transpose is needed.
    Wk / Wv are pre-transposed to (in, out) for the x @ W form.  Cache the
    returned dict so the transposes never run in the per-call hot path.
    """
    f32 = lambda a: jnp.asarray(a, jnp.float32)
    return {
        "wq": f32(params["wq"]),
        "bq": f32(params["bq"]).reshape(1, -1),
        "wk_t": f32(params["wk"]).T,
        "bk": f32(params["bk"]).reshape(1, -1),
        "wv_t": f32(params["wv"]).T,
        "bv": f32(params["bv"]).reshape(1, -1),
        "_prepared": True,
    }


def _cross_attn_kernel(w_ref, b_ref, v_ref, img_ref, out_ref, *, n_valid, norm_fact):
    # Per grid step (TB batches at a time):
    #   w_ref   : (1, Dp)   folded score weight  w_eff = k_row @ Wq
    #   b_ref   : (1, 1)    folded score bias    b_eff = <bq, k_row>
    #   v_ref   : (1, Dp)   value row            v_row = cap @ Wv^T + bv
    #   img_ref : (TB, Np, Dp)
    #   out_ref : (TB, Np, Dp)
    tb, np_, dp = img_ref.shape

    img = img_ref[...].astype(jnp.float32)                               # (TB, Np, Dp)
    w_eff = w_ref[...].reshape(1, 1, dp)                                 # (1, 1, Dp)
    b_eff = b_ref[...].reshape(1, 1, 1)                                  # (1, 1, 1)

    # scores[b, n] = <img[b, n, :], w_eff> + b_eff
    # (broadcast multiply + lane reduction; no matmul, no transpose)
    s = jnp.sum(img * w_eff, axis=-1, keepdims=True) + b_eff             # (TB, Np, 1)

    # ReLU, softmax over the region axis (dim=1), THEN scale by 1/sqrt(D)
    # -- exactly the reference ordering (do not "fix" to pre-softmax scaling).
    r = jnp.maximum(s, 0.0)
    if np_ != n_valid:
        # Padded (zero) image regions must not contribute to the softmax.
        region = jax.lax.broadcasted_iota(jnp.int32, (tb, np_, 1), 1)
        r = jnp.where(region < n_valid, r, -jnp.inf)
    m = jnp.max(r, axis=1, keepdims=True)                                # (TB, 1, 1)
    e = jnp.exp(r - m)
    denom = jnp.sum(e, axis=1, keepdims=True)                            # (TB, 1, 1)
    atten = e * (norm_fact / denom)                                      # (TB, Np, 1)

    # output[b, n, :] = atten[b, n] * V_row   (outer product via lane broadcast)
    out_ref[...] = (atten * v_ref[...].reshape(1, 1, dp)).astype(out_ref.dtype)


def cross_attention_single(cap_emb, img_emb, params, *, stream_bf16=False):
    """Pallas TPU forward of the reference module.

    cap_emb: (D,) or (1, D), img_emb: (B, N, D) -> (B, N, D) float32/bf16.
    `params` may be raw PyTorch-layout weights or the output of prepare_params.
    """
    if not isinstance(params, dict) or not params.get("_prepared", False):
        params = prepare_params(params)

    img_dtype_in = jnp.float32
    io_dtype = jnp.bfloat16 if stream_bf16 else jnp.float32
    io_size = jnp.dtype(io_dtype).itemsize

    img_emb = jnp.asarray(img_emb, img_dtype_in)
    B, N, D = img_emb.shape
    cap = jnp.asarray(cap_emb, jnp.float32).reshape(1, -1)
    assert cap.shape[-1] == D
    norm_fact = 1.0 / math.sqrt(D)

    # ---- per-call fold (tiny D-length matvecs, runs as cheap XLA ops) -------
    k_row = cap @ params["wk_t"] + params["bk"]                          # (1, D)
    v_row = cap @ params["wv_t"] + params["bv"]                          # (1, D)
    w_eff = k_row @ params["wq"]                                         # (1, D)
    b_eff = jnp.sum(params["bq"] * k_row, axis=-1, keepdims=True)        # (1, 1)

    # ---- pad to TPU-friendly shapes (lane=128, sublane=8/16) ----------------
    Dp = _round_up(D, 128)
    sub = 16 if stream_bf16 else 8
    Np = _round_up(N, sub)

    # Memory-bound kernel: target ~1024 rows (TB*Np) per step to amortize the
    # ~0.35 us/step pipeline overhead, capped by a per-generation VMEM budget.
    vmem_cap = _vmem_capacity_bytes()
    per_row_bytes = Dp * (4 * io_size + 12)       # dbl-buffered img+out + f32 temps
    row_cap = max(sub, (vmem_cap - 16 * 2**20) // (2 * per_row_bytes))
    target_rows = int(min(1024, row_cap))
    tb = max(1, min(B, _cdiv(target_rows, Np)))
    # Megacore (v7x) split: only when each half still has a full pass of work,
    # so tiny workloads on single-TC v5e/v6e keep a single grid step.
    if B > 1 and _cdiv(B, tb) < 2 and B * Np >= 512:
        tb = _cdiv(B, 2)
    Bp = _round_up(B, tb)
    grid = (Bp // tb,)

    def pad2(a, r, c):
        return jnp.pad(a, ((0, r - a.shape[0]), (0, c - a.shape[1])))

    img_p = jnp.pad(img_emb, ((0, Bp - B), (0, Np - N), (0, Dp - D))).astype(io_dtype)
    w_eff_p = pad2(w_eff, 1, Dp)
    v_row_p = pad2(v_row, 1, Dp)

    kernel = partial(_cross_attn_kernel, n_valid=N, norm_fact=norm_fact)

    # Advisory cost estimate: folded structure is memory-bound streaming.
    flops = Bp * Np * (3 * Dp + 8)
    bytes_accessed = io_size * 2 * Bp * Np * Dp + grid[0] * 4 * (2 * Dp + 1)
    cost = pl.CostEstimate(flops=flops, transcendentals=Bp * Np,
                           bytes_accessed=bytes_accessed)

    # Exact per-step footprint + headroom, capped below physical VMEM.
    step_bytes = tb * Np * per_row_bytes + 4 * (4 * Dp + 256)
    vmem_limit = int(min(max(vmem_cap - 8 * 2**20, 32 * 2**20),
                         max(32 * 2**20, 2 * step_bytes + 2 * 2**20)))

    grid_spec = pltpu.PrefetchScalarGridSpec(
        num_scalar_prefetch=0,
        grid=grid,
        in_specs=[
            pl.BlockSpec((1, Dp), lambda b: (0, 0)),           # w_eff (grid-const)
            pl.BlockSpec((1, 1), lambda b: (0, 0)),            # b_eff (grid-const)
            pl.BlockSpec((1, Dp), lambda b: (0, 0)),           # v_row (grid-const)
            pl.BlockSpec((tb, Np, Dp), lambda b: (b, 0, 0)),   # img block (streamed)
        ],
        out_specs=pl.BlockSpec((tb, Np, Dp), lambda b: (b, 0, 0)),
    )

    out_p = pl.pallas_call(
        kernel,
        out_shape=jax.ShapeDtypeStruct((Bp, Np, Dp), io_dtype),
        grid_spec=grid_spec,
        compiler_params=pltpu.CompilerParams(
            dimension_semantics=("parallel",),
            vmem_limit_bytes=vmem_limit),
        cost_estimate=cost,
    )(w_eff_p, b_eff, v_row_p, img_p)

    return out_p[:B, :N, :D]


def _reference(cap_emb, img_emb, params):
    """Pure-JAX reference mirroring the PyTorch forward (with intended ReLU)."""
    B, N, D = img_emb.shape
    norm_fact = 1.0 / math.sqrt(D)
    cap = jnp.broadcast_to(jnp.reshape(cap_emb, (1, 1, D)), (B, 1, D))
    Q = img_emb @ params["wq"].T + params["bq"]          # (B, N, D)
    K = cap @ params["wk"].T + params["bk"]              # (B, 1, D)
    V = cap @ params["wv"].T + params["bv"]              # (B, 1, D)
    scores = jnp.einsum("bnd,bkd->bnk", Q, K)            # (B, N, 1)
    atten = jax.nn.softmax(jax.nn.relu(scores), axis=1) * norm_fact
    return jnp.einsum("bnk,bkd->bnd", atten, V)          # (B, N, D)


if __name__ == "__main__":
    B, N, D = 2, 8, 32   # batch (images), regions per image, embed_dim

    key = jax.random.PRNGKey(0)
    k_cap, k_img, kq, kbq, kk, kbk, kv, kbv = jax.random.split(key, 8)

    cap_emb = jax.random.normal(k_cap, (1, D), dtype=jnp.float32)
    img_emb = jax.random.normal(k_img, (B, N, D), dtype=jnp.float32)

    # Deterministic Linear params (PyTorch Linear weight shape: (out, in)).
    bound = 1.0 / math.sqrt(D)
    params = {
        "wq": jax.random.uniform(kq, (D, D), jnp.float32, -bound, bound),
        "bq": jax.random.uniform(kbq, (D,), jnp.float32, -bound, bound),
        "wk": jax.random.uniform(kk, (D, D), jnp.float32, -bound, bound),
        "bk": jax.random.uniform(kbk, (D,), jnp.float32, -bound, bound),
        "wv": jax.random.uniform(kv, (D, D), jnp.float32, -bound, bound),
        "bv": jax.random.uniform(kbv, (D,), jnp.float32, -bound, bound),
    }

    # One-time parameter prep (cache this per model in real use).
    prepared = prepare_params(params)

    out = cross_attention_single(cap_emb, img_emb, prepared)
    out = jax.block_until_ready(out)

    ref = _reference(cap_emb, img_emb, params)
    assert out.shape == (B, N, D), out.shape
    err = float(jnp.max(jnp.abs(out - ref)))
    assert jnp.allclose(out, ref, atol=1e-5, rtol=1e-5), err

    print("KERNEL_OK")
</pallas_src>

<mosaic_0001>
module attributes {stable_mosaic.version = 11 : i64} {
  func.func @_cross_attn_kernel(%arg0: i32, %arg1: memref<1x128xf32, #tpu.memory_space<vmem>>, %arg2: memref<1x1xf32, #tpu.memory_space<vmem>>, %arg3: memref<1x128xf32, #tpu.memory_space<vmem>>, %arg4: memref<2x8x128xf32, #tpu.memory_space<vmem>>, %arg5: memref<2x8x128xf32, #tpu.memory_space<vmem>>) attributes {dimension_semantics = [#tpu.dimension_semantics<parallel>], iteration_bounds = array<i64: 1>, scalar_prefetch = 0 : i64, scratch_operands = 0 : i64, tpu.core_type = #tpu.core_type<tc>, window_params = [{pipeline_mode = #tpu.pipeline_mode<synchronous>, transform_indices = @transform_0, window_bounds = array<i64: 1, 128>}, {pipeline_mode = #tpu.pipeline_mode<synchronous>, transform_indices = @transform_1, window_bounds = array<i64: 1, 1>}, {pipeline_mode = #tpu.pipeline_mode<synchronous>, transform_indices = @transform_2, window_bounds = array<i64: 1, 128>}, {transform_indices = @transform_3, window_bounds = array<i64: 2, 8, 128>}, {transform_indices = @transform_4, window_bounds = array<i64: 2, 8, 128>}]} {
    %c0 = arith.constant 0 : index
    %c0_0 = arith.constant 0 : index
    %c0_1 = arith.constant 0 : index
    %0 = vector.load %arg4[%c0, %c0_0, %c0_1] : memref<2x8x128xf32, #tpu.memory_space<vmem>>, vector<2x8x128xf32>
    %c0_2 = arith.constant 0 : index
    %c0_3 = arith.constant 0 : index
    %1 = vector.load %arg1[%c0_2, %c0_3] : memref<1x128xf32, #tpu.memory_space<vmem>>, vector<1x128xf32>
    %2 = vector.shape_cast %1 : vector<1x128xf32> to vector<1x1x128xf32>
    %c0_4 = arith.constant 0 : index
    %c0_5 = arith.constant 0 : index
    %3 = vector.load %arg2[%c0_4, %c0_5] : memref<1x1xf32, #tpu.memory_space<vmem>>, vector<1x1xf32>
    %4 = vector.shape_cast %3 : vector<1x1xf32> to vector<1x1x1xf32>
    %5 = vector.broadcast %2 : vector<1x1x128xf32> to vector<2x8x128xf32>
    %6 = arith.mulf %0, %5 : vector<2x8x128xf32>
    %cst = arith.constant dense<0.000000e+00> : vector<2x8xf32>
    %7 = vector.multi_reduction <add>, %6, %cst [2] : vector<2x8x128xf32> to vector<2x8xf32>
    %8 = vector.shape_cast %7 : vector<2x8xf32> to vector<2x8x1xf32>
    %9 = vector.broadcast %4 : vector<1x1x1xf32> to vector<2x8x1xf32>
    %10 = arith.addf %8, %9 : vector<2x8x1xf32>
    %cst_6 = arith.constant 0.000000e+00 : f32
    %11 = vector.broadcast %cst_6 : f32 to vector<2x8x1xf32>
    %12 = arith.maximumf %10, %11 : vector<2x8x1xf32>
    %cst_7 = arith.constant dense<0xFF800000> : vector<2x1xf32>
    %13 = vector.multi_reduction <maximumf>, %12, %cst_7 [1] : vector<2x8x1xf32> to vector<2x1xf32>
    %14 = vector.shape_cast %13 : vector<2x1xf32> to vector<2x1x1xf32>
    %15 = vector.broadcast %14 : vector<2x1x1xf32> to vector<2x8x1xf32>
    %16 = arith.subf %12, %15 : vector<2x8x1xf32>
    %17 = math.exp %16 : vector<2x8x1xf32>
    %cst_8 = arith.constant dense<0.000000e+00> : vector<2x1xf32>
    %18 = vector.multi_reduction <add>, %17, %cst_8 [1] : vector<2x8x1xf32> to vector<2x1xf32>
    %19 = vector.shape_cast %18 : vector<2x1xf32> to vector<2x1x1xf32>
    %cst_9 = arith.constant 0.176776692 : f32
    %20 = vector.broadcast %cst_9 : f32 to vector<2x1x1xf32>
    %21 = arith.divf %20, %19 : vector<2x1x1xf32>
    %22 = vector.broadcast %21 : vector<2x1x1xf32> to vector<2x8x1xf32>
    %23 = arith.mulf %17, %22 : vector<2x8x1xf32>
    %c0_10 = arith.constant 0 : index
    %c0_11 = arith.constant 0 : index
    %24 = vector.load %arg3[%c0_10, %c0_11] : memref<1x128xf32, #tpu.memory_space<vmem>>, vector<1x128xf32>
    %25 = vector.shape_cast %24 : vector<1x128xf32> to vector<1x1x128xf32>
    %26 = vector.broadcast %23 : vector<2x8x1xf32> to vector<2x8x128xf32>
    %27 = vector.broadcast %25 : vector<1x1x128xf32> to vector<2x8x128xf32>
    %28 = arith.mulf %26, %27 : vector<2x8x128xf32>
    %c0_12 = arith.constant 0 : index
    %c0_13 = arith.constant 0 : index
    %c0_14 = arith.constant 0 : index
    %29 = vector.load %arg5[%c0_12, %c0_13, %c0_14] : memref<2x8x128xf32, #tpu.memory_space<vmem>>, vector<2x8x128xf32>
    tpu.vector_store %arg5[%c0_12, %c0_13, %c0_14], %28 {strides = array<i32>} : memref<2x8x128xf32, #tpu.memory_space<vmem>>, vector<2x8x128xf32>,
    return
  }
  func.func @transform_0(%arg0: i32) -> (i32, i32) {
    %c0_i32 = arith.constant 0 : i32
    %c0_i32_0 = arith.constant 0 : i32
    %c0_i32_1 = arith.constant 0 : i32
    return %c0_i32, %c0_i32_0 : i32, i32
  }
  func.func @transform_1(%arg0: i32) -> (i32, i32) {
    %c0_i32 = arith.constant 0 : i32
    %c0_i32_0 = arith.constant 0 : i32
    %c0_i32_1 = arith.constant 0 : i32
    return %c0_i32, %c0_i32_0 : i32, i32
  }
  func.func @transform_2(%arg0: i32) -> (i32, i32) {
    %c0_i32 = arith.constant 0 : i32
    %c0_i32_0 = arith.constant 0 : i32
    %c0_i32_1 = arith.constant 0 : i32
    return %c0_i32, %c0_i32_0 : i32, i32
  }
  func.func @transform_3(%arg0: i32) -> (i32, i32, i32) {
    %c0_i32 = arith.constant 0 : i32
    %c0_i32_0 = arith.constant 0 : i32
    %c0_i32_1 = arith.constant 0 : i32
    return %arg0, %c0_i32, %c0_i32_0 : i32, i32, i32
  }
  func.func @transform_4(%arg0: i32) -> (i32, i32, i32) {
    %c0_i32 = arith.constant 0 : i32
    %c0_i32_0 = arith.constant 0 : i32
    %c0_i32_1 = arith.constant 0 : i32
    return %arg0, %c0_i32, %c0_i32_0 : i32, i32, i32
  }
}

</mosaic_0001>

<llo_original>
// kernel: tpu_custom_call.1
$region0: #{tpu_custom_call.1}
  #allocation0 [shape = 'u32[]', space=smem, size = 0x4, offset = 0x4, fixed_abs, tag = 'smem constant byte address 0x4 - core index']
  #allocation1 [shape = 'u32[144,128]{1,0:T(1,128)}', space=vmem, size = 0x12000, scoped, tag = 'internal scratch']
  #allocation2 [shape = 'f32[1,1]{1,0:T(1,128)S(1)}', space=vmem, size = 0x200, scoped, tag = 'scoped memory for tpu_custom_call.1']
  %s0 = inlined_call_operand.vmem [shape: f32[1,128], index: 0, kind: input, shape index: {}]
  %s1 = inlined_call_operand.<no memory space> [shape: f32[1,1], index: 1, kind: input, shape index: {}]
  %s2 = inlined_call_operand.vmem [shape: f32[1,128], index: 2, kind: input, shape index: {}]
  %s3 = inlined_call_operand.hbm [shape: f32[2,8,128], index: 3, kind: input, shape index: {}]
  %s4 = inlined_call_operand.hbm [shape: f32[2,8,128], index: 4, kind: output, shape index: {}]
  %s5 = sld [smem:[#allocation0]]
  $region30: #{tpu_custom_call.1} parent=0
    _
  %s7 = ssub.s32 1, %s5
  %s8 = scalar_select 0, %s7, %s5
  %v9 = vstv %s1
  %10 = vst [vmem:[#allocation2] sm:$0x1] %v9
  $region1: #{tpu_custom_call.1} parent=0
    #allocation3 [shape = 'u8[8192]{0}', space=vmem, size = 0x2000, scoped, tag = 'input window, operand 3, single buffered']
    #allocation4 [shape = 's32[1]{0}', space=sflag, size = 0x4, scoped, tag = 'scoped memory for tpu_custom_call.1']
    #allocation5 [shape = 's32[1]{0}', space=sflag, size = 0x4, scoped, tag = 'scoped memory for tpu_custom_call.1']
    #allocation6 [shape = 'u8[8192]{0}', space=vmem, size = 0x2000, scoped, tag = 'output window, operand 0, single buffered']
    %11 = vsyncpa [#allocation4], 0
    %12 = vsyncpa [#allocation5], 0
    // Predicated region
    $region2: #{tpu_custom_call.1} parent=1 // pred_check
      _
    $region3: #{tpu_custom_call.1} parent=1 // pred_check_branch
      %14 = sbr.rel (0) target = $region5
    $region4: #{tpu_custom_call.1} parent=1 // pred_region
      _
    $region5: #{tpu_custom_call.1} parent=1 // pred_fallthru
      _
    // Predicated region
    $region6: #{tpu_custom_call.1} parent=1 // pred_check
      _
    $region7: #{tpu_custom_call.1} parent=1 // pred_check_branch
      %16 = sbr.rel (0) target = $region9
    $region8: #{tpu_custom_call.1} parent=1 // pred_region
      _
    $region9: #{tpu_custom_call.1} parent=1 // pred_fallthru
      _
    // Predicated region
    $region10: #{tpu_custom_call.1} parent=1 // pred_check
      _
    $region11: #{tpu_custom_call.1} parent=1 // pred_check_branch
      %18 = sbr.rel (0) target = $region13
    $region12: #{tpu_custom_call.1} parent=1 // pred_region
      _
    $region13: #{tpu_custom_call.1} parent=1 // pred_fallthru
      _
    // Predicated region
    $region14: #{tpu_custom_call.1} parent=1 // pred_check
      _
    $region15: #{tpu_custom_call.1} parent=1 // pred_check_branch
      %20 = sbr.rel (0) target = $region17
    $region16: #{tpu_custom_call.1} parent=1 // pred_region
      %s22 = ssub.s32 256, 256
      %23 = vsyncadd [#allocation4], %s22
      %s24 = sshll.u32 [#allocation3], 4
      %s25 = int_to_ptr.vmem [resolvable:$true] %s24
      %30 = dma.hbm_to_vmem [thread:$0]  %s3, 256, %s25, [#allocation4], 128, 128, 8
    $region17: #{tpu_custom_call.1} parent=1 // pred_fallthru
      _
    // Predicated region
    $region18: #{tpu_custom_call.1} parent=1 // pred_check
      _
    $region19: #{tpu_custom_call.1} parent=1 // pred_check_branch
      %32 = sbr.rel (0) target = $region21
    $region20: #{tpu_custom_call.1} parent=1 // pred_region
      %33 = dma.done [#allocation4], 256
    $region21: #{tpu_custom_call.1} parent=1 // pred_fallthru
      _
    %v34 = vld [vmem:[#allocation3] sm:$0xff]
    %v35 = vld [vmem:[#allocation3 + $0x8] sm:$0xff]
    %v36 = vld [vmem:[%s0] sm:$0x1]
    %v37 = vld [vmem:[#allocation2] sm:$0x1]
    %v39 = vlaneseq
    %v40 = vshrl.u32 %v39, 7
    %v41 = vsub.s32 0, %v40
    %v42 = vrot.slane %v36, %v41
    %v44 = vmul.f32 %v34, %v42
    %v45 = vmul.f32 %v35, %v42
    %46 = vadd.xlane.f32.xlu0 %v44
    %v47 = vpop.xlane.xlu0 %46
    %48 = vadd.xlane.f32.xlu0 %v45
    %v49 = vpop.xlane.xlu0 %48
    %v51 = vlaneseq
    %v52 = vshrl.u32 %v51, 7
    %v53 = vsub.s32 0, %v52
    %v54 = vrot.slane %v37, %v53
    %v56 = vadd.f32 %v47, %v54
    %v57 = vadd.f32 %v49, %v54
    %v58 = vmax.f32 %v56, 0.0
    %v59 = vmax.f32 %v57, 0.0
    %vm60 = vcmask 7168
    %v61 = vsel %vm60, %v58, -inf
    %v62 = vrot.slane %v61, 4
    %v63 = vmax.f32 %v61, %v62
    %v64 = vrot.slane %v63, 2
    %v65 = vmax.f32 %v63, %v64
    %v66 = vrot.slane %v65, 1
    %v67 = vmax.f32 %v65, %v66
    %v68 = vsel %vm60, %v59, -inf
    %v69 = vrot.slane %v68, 4
    %v70 = vmax.f32 %v68, %v69
    %v71 = vrot.slane %v70, 2
    %v72 = vmax.f32 %v70, %v71
    %v73 = vrot.slane %v72, 1
    %v74 = vmax.f32 %v72, %v73
    %v75 = vsub.f32 %v58, %v67
    %v76 = vsub.f32 %v59, %v74
    %v77 = vmul.f32 %v75, 1.442695
    %v78 = vpow.pop %v77
    %v79 = vmul.f32 %v76, 1.442695
    %v80 = vpow.pop %v79
    %v81 = vsel %vm60, %v78, 0.0
    %v82 = vrot.slane %v81, 4
    %v83 = vadd.f32 %v81, %v82
    %v84 = vrot.slane %v83, 2
    %v85 = vadd.f32 %v83, %v84
    %v86 = vrot.slane %v85, 1
    %v87 = vadd.f32 %v85, %v86
    %v88 = vsel %vm60, %v80, 0.0
    %v89 = vrot.slane %v88, 4
    %v90 = vadd.f32 %v88, %v89
    %v91 = vrot.slane %v90, 2
    %v92 = vadd.f32 %v90, %v91
    %v93 = vrot.slane %v92, 1
    %v94 = vadd.f32 %v92, %v93
    %v95 = vrcp.pop %v87
    %v96 = vmul.f32 0.17677669, %v95
    %v97 = vrcp.pop %v94
    %v98 = vmul.f32 0.17677669, %v97
    %v99 = vmul.f32 %v78, %v96
    %v100 = vmul.f32 %v80, %v98
    %v101 = vld [vmem:[%s2] sm:$0x1]
    %103 = vset.pattern.permute.xlu0 0
    %104 = vperm.xlu0 %103, %v99
    %v105 = vpop.permute.xlu0 %104
    %108 = vset.pattern.permute.xlu0 0
    %109 = vperm.xlu0 %108, %v100
    %v110 = vpop.permute.xlu0 %109
    %v113 = vlaneseq
    %v114 = vshrl.u32 %v113, 7
    %v115 = vsub.s32 0, %v114
    %v116 = vrot.slane %v101, %v115
    %v118 = vmul.f32 %v105, %v116
    %v119 = vmul.f32 %v110, %v116
    %120 = vst [vmem:[#allocation6] sm:$0xff] %v118
    %121 = vst [vmem:[#allocation6 + $0x8] sm:$0xff] %v119
    // Predicated region
    $region22: #{tpu_custom_call.1} parent=1 // pred_check
      _
    $region23: #{tpu_custom_call.1} parent=1 // pred_check_branch
      %123 = sbr.rel (0) target = $region25
    $region24: #{tpu_custom_call.1} parent=1 // pred_region
      %s125 = ssub.s32 256, 256
      %126 = vsyncadd [#allocation5], %s125
      %s127 = sshll.u32 [#allocation6], 4
      %s128 = int_to_ptr.vmem [resolvable:$true] %s127
      %133 = dma.vmem_to_hbm [thread:$0]  %s128, 256, %s4, [#allocation5], 128, 128, 8
    $region25: #{tpu_custom_call.1} parent=1 // pred_fallthru
      _
    // Predicated region
    $region26: #{tpu_custom_call.1} parent=1 // pred_check
      _
    $region27: #{tpu_custom_call.1} parent=1 // pred_check_branch
      %135 = sbr.rel (0) target = $region29
    $region28: #{tpu_custom_call.1} parent=1 // pred_region
      %136 = dma.done [#allocation5], 256
    $region29: #{tpu_custom_call.1} parent=1 // pred_fallthru
      _
    %137 = vsyncpa [#allocation4], 1
    %138 = vsyncpa [#allocation5], 1

</llo_original>
